<compile_context>
chip_gen: v5e
topology: v5e:2x2
jax: 0.10.0
libtpu: 0.0.40
codegen_flags: <defaults>
</compile_context>

<pallas_src>
import jax
import jax.numpy as jnp
from jax import lax
from jax.experimental import pallas as pl
from jax.experimental.pallas import tpu as pltpu


def _round_up(x, m):
    return ((x + m - 1) // m) * m


def _device_defaults():
    """(vmem_limit_bytes, preferred_tile_n) per TPU generation."""
    kind = ""
    try:
        kind = jax.devices()[0].device_kind.lower()
    except Exception:
        pass
    big_vmem = ("v5" in kind) or ("v6" in kind)       # 128 MiB physical VMEM
    if big_vmem:
        return 64 * 1024 * 1024, 2048
    return 48 * 1024 * 1024, 1024                      # v7x-class: 64 MiB VMEM


def _pick_d_block(d_pad, target):
    """Largest multiple of 128 that divides d_pad and is <= target."""
    best = 128
    k = 128
    while k <= min(d_pad, target):
        if d_pad % k == 0:
            best = k
        k += 128
    return best


def _global_sa_kernel(
    tile_lo_ref,   # [num_tiles] i32 (SMEM) first graph id in row tile
    tile_hi_ref,   # [num_tiles] i32 (SMEM) last graph id in row tile
    offs_ref,      # [B+1]       i32 (SMEM) per-graph start row offsets (offs[B] == N)
    xin_ref,       # [tile_n, C_in]        packed [x | pos] row tile
    w1_ref,        # [C_in, H_pad]
    b1_ref,        # [1, H_pad] f32
    w2_ref,        # [H_pad, D_blk]        column block of w2
    b2_ref,        # [1, D_blk] f32
    out_ref,       # [B_pad, D_blk] f32    resident max accumulator for this D block
):
    t = pl.program_id(1)          # row-tile (reduction) axis

    # --- init resident accumulator once per D block (0 is the identity: f >= 0) ---
    @pl.when(t == 0)
    def _():
        out_ref[...] = jnp.zeros_like(out_ref)

    # --- fused 2-layer MLP on this row tile / output-column block ---
    h = jnp.dot(xin_ref[...], w1_ref[...], preferred_element_type=jnp.float32)
    h = jnp.maximum(h + b1_ref[...], 0.0)                     # [tile_n, H_pad] f32
    f = jnp.dot(h.astype(w2_ref.dtype), w2_ref[...],
                preferred_element_type=jnp.float32)
    f = jnp.maximum(f + b2_ref[...], 0.0)                     # [tile_n, D_blk] f32, >= 0

    tile_n = xin_ref.shape[0]
    base = t * tile_n
    b_lo = tile_lo_ref[t]
    b_hi = tile_hi_ref[t]

    # Tile fully inside one graph's row range (also excludes the zero-padded tail,
    # since offs[B] == N): unmasked reduce + one RMW.
    single = (b_lo == b_hi) & (base + tile_n <= offs_ref[b_lo + 1])

    @pl.when(single)
    def _():
        seg_max = jnp.max(f, axis=0, keepdims=True)           # [1, D_blk]
        cur = out_ref[pl.ds(b_lo, 1), :]
        out_ref[pl.ds(b_lo, 1), :] = jnp.maximum(cur, seg_max)

    # Boundary-straddling (or padded-tail) tile: masked per-graph loop over only
    # the graphs this tile actually spans. Padded rows (row >= N) never match.
    @pl.when(jnp.logical_not(single))
    def _():
        row = lax.broadcasted_iota(jnp.int32, (tile_n, 1), 0) + base

        def seg_update(b, carry):
            start = offs_ref[b]
            end = offs_ref[b + 1]
            mask = (row >= start) & (row < end)                # [tile_n, 1]
            seg_max = jnp.max(jnp.where(mask, f, 0.0), axis=0, keepdims=True)
            cur = out_ref[pl.ds(b, 1), :]
            out_ref[pl.ds(b, 1), :] = jnp.maximum(cur, seg_max)
            return carry

        lax.fori_loop(b_lo, b_hi + 1, seg_update, 0)


def global_sa_module(x, pos, batch, params, num_graphs, *,
                     tile_n=None, d_block=None,
                     matmul_dtype=jnp.bfloat16,
                     vmem_limit_bytes=None):
    """JAX wrapper reproducing GlobalSAModule.forward.

    x     : [N, C_x] f32
    pos   : [N, 3]   f32
    batch : [N]      int  graph id per node, SORTED ascending, ids < num_graphs
    params: dict w1 [C_x+3, H], b1 [H], w2 [H, D], b2 [D]
    returns (pooled [B, D], pos_out [B, 3] zeros, batch_out [B] arange)
    """
    n, c_x = x.shape
    assert pos.shape == (n, 3)
    w1, b1, w2, b2 = params["w1"], params["b1"], params["w2"], params["b2"]
    c_in = c_x + 3
    assert w1.shape[0] == c_in
    hid = w1.shape[1]
    d_out = w2.shape[1]

    default_vmem, default_tile = _device_defaults()
    if vmem_limit_bytes is None:
        vmem_limit_bytes = default_vmem

    # ---- lane / sublane padded sizes ----
    h_pad = _round_up(hid, 128)
    d_pad = _round_up(d_out, 128)
    b_pad = max(8, _round_up(num_graphs, 8))
    if d_block is None:
        d_block = 512 if default_tile == 2048 else 256        # v5e/v6e vs v7x-class
    d_blk = _pick_d_block(d_pad, d_block)
    num_dblk = d_pad // d_blk

    # ---- padded weights / biases (biases stay f32, weights in matmul_dtype) ----
    w1p = jnp.zeros((c_in, h_pad), jnp.float32).at[:, :hid].set(w1).astype(matmul_dtype)
    b1p = jnp.zeros((1, h_pad), jnp.float32).at[0, :hid].set(b1)
    w2p = jnp.zeros((h_pad, d_pad), jnp.float32).at[:hid, :d_out].set(w2).astype(matmul_dtype)
    b2p = jnp.zeros((1, d_pad), jnp.float32).at[0, :d_out].set(b2)

    # ---- row-tile size within the per-generation VMEM budget ----
    in_bytes = jnp.dtype(matmul_dtype).itemsize
    per_row = 2 * _round_up(c_in, 128) * in_bytes + 4 * h_pad + 4 * d_blk
    cap = max(8, (vmem_limit_bytes // 2) // per_row)
    if tile_n is None:
        tile_n = default_tile
    tile_n = int(max(8, (min(int(tile_n), cap, 4096) // 8) * 8))
    tile_n = min(tile_n, _round_up(n, 8))
    n_pad = _round_up(n, tile_n)
    num_tiles = n_pad // tile_n

    # ---- packed (concat-fused) input slab, zero-padded rows at the tail ----
    xin = jnp.zeros((n_pad, c_in), matmul_dtype)
    xin = xin.at[:n, :c_x].set(x.astype(matmul_dtype))
    xin = xin.at[:n, c_x:].set(pos.astype(matmul_dtype))

    # ---- scalar-prefetch metadata (SMEM): graph offsets + per-tile graph range ----
    batch_i = batch.astype(jnp.int32)
    counts = jnp.bincount(batch_i, length=num_graphs)
    offs = jnp.concatenate(
        [jnp.zeros((1,), jnp.int32), jnp.cumsum(counts).astype(jnp.int32)]
    )                                                          # [B+1], offs[B] == N
    t_idx = jnp.arange(num_tiles, dtype=jnp.int32)
    tile_lo = batch_i[jnp.minimum(t_idx * tile_n, n - 1)]
    tile_hi = batch_i[jnp.minimum((t_idx + 1) * tile_n, n) - 1]

    def run(single_buffer_weights):
        def const_spec(shape):
            if single_buffer_weights:
                return pl.BlockSpec(shape, lambda d, t, lo, hi, off: (0, 0),
                                    pipeline_mode=pl.Buffered(1))
            return pl.BlockSpec(shape, lambda d, t, lo, hi, off: (0, 0))

        grid_spec = pltpu.PrefetchScalarGridSpec(
            num_scalar_prefetch=3,
            grid=(num_dblk, num_tiles),     # (parallel D blocks, row-tile reduction)
            in_specs=[
                pl.BlockSpec((tile_n, c_in), lambda d, t, lo, hi, off: (t, 0)),  # x|pos
                const_spec((c_in, h_pad)),                                       # w1
                const_spec((1, h_pad)),                                          # b1
                pl.BlockSpec((h_pad, d_blk), lambda d, t, lo, hi, off: (0, d)),  # w2 col-blk
                pl.BlockSpec((1, d_blk), lambda d, t, lo, hi, off: (0, d)),      # b2 col-blk
            ],
            out_specs=pl.BlockSpec((b_pad, d_blk), lambda d, t, lo, hi, off: (0, d)),
        )
        return pl.pallas_call(
            _global_sa_kernel,
            out_shape=jax.ShapeDtypeStruct((b_pad, d_pad), jnp.float32),
            grid_spec=grid_spec,
            compiler_params=pltpu.CompilerParams(
                dimension_semantics=("parallel", "arbitrary"),
                vmem_limit_bytes=vmem_limit_bytes,
            ),
        )(tile_lo, tile_hi, offs, xin, w1p, b1p, w2p, b2p)

    try:
        pooled_pad = run(single_buffer_weights=True)
    except Exception:
        # pipeline_mode=pl.Buffered(1) not supported by this jax build; fallback
        # only costs double-buffered resident weights.
        pooled_pad = run(single_buffer_weights=False)

    pooled = pooled_pad[:num_graphs, :d_out]
    pos_out = jnp.zeros((num_graphs, 3), dtype=pos.dtype)
    batch_out = jnp.arange(num_graphs, dtype=batch.dtype)
    return pooled, pos_out, batch_out


def _reference(x, pos, batch, params, num_graphs):
    """Pure-JAX reference for correctness checking (f32)."""
    xcat = jnp.concatenate([x, pos], axis=1)
    h = jnp.maximum(xcat @ params["w1"] + params["b1"], 0.0)
    f = jnp.maximum(h @ params["w2"] + params["b2"], 0.0)
    pooled = jnp.stack(
        [jnp.max(jnp.where((batch == b)[:, None], f, -jnp.inf), axis=0)
         for b in range(num_graphs)]
    )
    return pooled


if __name__ == "__main__":
    key = jax.random.PRNGKey(0)
    k_x, k_pos, k_w1, k_b1, k_w2, k_b2 = jax.random.split(key, 6)

    # Small shapes consistent with the module.
    N = 20          # total points across all graphs (deliberately not a tile multiple)
    C_X = 13        # input feature channels (C_X + 3 = 16 after concat with pos)
    HID = 32        # MLP hidden width
    D_OUT = 64      # MLP output width
    NUM_GRAPHS = 2  # batch size B

    x = jax.random.normal(k_x, (N, C_X), dtype=jnp.float32)
    pos = jax.random.normal(k_pos, (N, 3), dtype=jnp.float32)
    # nodes grouped (sorted) by graph id, as in PyG batching; boundary at row 5
    batch = jnp.concatenate([jnp.zeros(5, jnp.int32), jnp.ones(N - 5, jnp.int32)])

    c_in = C_X + 3
    params = {
        "w1": jax.random.normal(k_w1, (c_in, HID), jnp.float32) * (1.0 / c_in**0.5),
        "b1": jax.random.normal(k_b1, (HID,), jnp.float32) * 0.01,
        "w2": jax.random.normal(k_w2, (HID, D_OUT), jnp.float32) * (1.0 / HID**0.5),
        "b2": jax.random.normal(k_b2, (D_OUT,), jnp.float32) * 0.01,
    }

    ref = _reference(x, pos, batch, params, NUM_GRAPHS)

    # 1) f32 path, tile_n=8: exercises the multi-tile pipeline, the masked
    #    boundary / padded-tail path (tiles 0 and 2) and the single-graph fast
    #    path (tile 1); matches torch numerics tightly.
    pooled_f32, pos_out, batch_out = jax.block_until_ready(
        global_sa_module(x, pos, batch, params, NUM_GRAPHS,
                         tile_n=8, matmul_dtype=jnp.float32)
    )
    assert pooled_f32.shape == (NUM_GRAPHS, D_OUT)
    assert jnp.allclose(pooled_f32, ref, atol=1e-5, rtol=1e-5)

    # 2) default path: bf16 MXU operands, auto tile / D-block / vmem settings.
    pooled_bf16, pos_out, batch_out = jax.block_until_ready(
        global_sa_module(x, pos, batch, params, NUM_GRAPHS)
    )
    assert pooled_bf16.shape == (NUM_GRAPHS, D_OUT)
    assert jnp.allclose(pooled_bf16, ref, atol=5e-2, rtol=5e-2)

    assert pos_out.shape == (NUM_GRAPHS, 3) and jnp.all(pos_out == 0)
    assert batch_out.shape == (NUM_GRAPHS,) and jnp.all(
        batch_out == jnp.arange(NUM_GRAPHS))

    print("KERNEL_OK")
</pallas_src>

<mosaic_0001>
module attributes {stable_mosaic.version = 11 : i64} {
  func.func @_global_sa_kernel(%arg0: i32, %arg1: i32, %arg2: memref<3xi32, #tpu.memory_space<smem>>, %arg3: memref<3xi32, #tpu.memory_space<smem>>, %arg4: memref<3xi32, #tpu.memory_space<smem>>, %arg5: memref<8x16xf32, #tpu.memory_space<vmem>>, %arg6: memref<16x128xf32, #tpu.memory_space<vmem>>, %arg7: memref<1x128xf32, #tpu.memory_space<vmem>>, %arg8: memref<128x128xf32, #tpu.memory_space<vmem>>, %arg9: memref<1x128xf32, #tpu.memory_space<vmem>>, %arg10: memref<8x128xf32, #tpu.memory_space<vmem>>) attributes {dimension_semantics = [#tpu.dimension_semantics<parallel>, #tpu.dimension_semantics<arbitrary>], iteration_bounds = array<i64: 1, 3>, scalar_prefetch = 3 : i64, scratch_operands = 0 : i64, tpu.core_type = #tpu.core_type<tc>, window_params = [{transform_indices = @transform_0, window_bounds = array<i64: 8, 16>}, {pipeline_mode = #tpu.pipeline_mode<synchronous>, transform_indices = @transform_1, window_bounds = array<i64: 16, 128>}, {pipeline_mode = #tpu.pipeline_mode<synchronous>, transform_indices = @transform_2, window_bounds = array<i64: 1, 128>}, {transform_indices = @transform_3, window_bounds = array<i64: 128, 128>}, {transform_indices = @transform_4, window_bounds = array<i64: 1, 128>}, {transform_indices = @transform_5, window_bounds = array<i64: 8, 128>}]} {
    %c0_i32 = arith.constant 0 : i32
    %0 = arith.cmpi eq, %arg1, %c0_i32 : i32
    %1 = arith.extui %0 : i1 to i32
    %c0_i32_0 = arith.constant 0 : i32
    %2 = arith.cmpi ne, %1, %c0_i32_0 : i32
    scf.if %2 {
      %cst_16 = arith.constant 0.000000e+00 : f32
      %35 = vector.broadcast %cst_16 : f32 to vector<8x128xf32>
      %c0_17 = arith.constant 0 : index
      %c0_18 = arith.constant 0 : index
      %36 = vector.load %arg10[%c0_17, %c0_18] : memref<8x128xf32, #tpu.memory_space<vmem>>, vector<8x128xf32>
      tpu.vector_store %arg10[%c0_17, %c0_18], %35 {strides = array<i32>} : memref<8x128xf32, #tpu.memory_space<vmem>>, vector<8x128xf32>,
    } else {
    }
    %c0 = arith.constant 0 : index
    %c0_1 = arith.constant 0 : index
    %3 = vector.load %arg5[%c0, %c0_1] : memref<8x16xf32, #tpu.memory_space<vmem>>, vector<8x16xf32>
    %c0_2 = arith.constant 0 : index
    %c0_3 = arith.constant 0 : index
    %4 = vector.load %arg6[%c0_2, %c0_3] : memref<16x128xf32, #tpu.memory_space<vmem>>, vector<16x128xf32>
    %cst = arith.constant dense<0.000000e+00> : vector<8x128xf32>
    %5 = tpu.matmul %3, %4, %cst {dimension_numbers = #tpu.dot_dimension_numbers<[1], [0], [0], [1], [0, 0, 1, 1], [], []>} : vector<8x16xf32>, vector<16x128xf32>, vector<8x128xf32> -> vector<8x128xf32>
    %c0_4 = arith.constant 0 : index
    %c0_5 = arith.constant 0 : index
    %6 = vector.load %arg7[%c0_4, %c0_5] : memref<1x128xf32, #tpu.memory_space<vmem>>, vector<1x128xf32>
    %7 = vector.broadcast %6 : vector<1x128xf32> to vector<8x128xf32>
    %8 = arith.addf %5, %7 : vector<8x128xf32>
    %cst_6 = arith.constant 0.000000e+00 : f32
    %9 = vector.broadcast %cst_6 : f32 to vector<8x128xf32>
    %10 = arith.maximumf %8, %9 : vector<8x128xf32>
    %c0_7 = arith.constant 0 : index
    %c0_8 = arith.constant 0 : index
    %11 = vector.load %arg8[%c0_7, %c0_8] : memref<128x128xf32, #tpu.memory_space<vmem>>, vector<128x128xf32>
    %cst_9 = arith.constant dense<0.000000e+00> : vector<8x128xf32>
    %12 = tpu.matmul %10, %11, %cst_9 {dimension_numbers = #tpu.dot_dimension_numbers<[1], [0], [0], [1], [0, 0, 1, 1], [], []>} : vector<8x128xf32>, vector<128x128xf32>, vector<8x128xf32> -> vector<8x128xf32>
    %c0_10 = arith.constant 0 : index
    %c0_11 = arith.constant 0 : index
    %13 = vector.load %arg9[%c0_10, %c0_11] : memref<1x128xf32, #tpu.memory_space<vmem>>, vector<1x128xf32>
    %14 = vector.broadcast %13 : vector<1x128xf32> to vector<8x128xf32>
    %15 = arith.addf %12, %14 : vector<8x128xf32>
    %cst_12 = arith.constant 0.000000e+00 : f32
    %16 = vector.broadcast %cst_12 : f32 to vector<8x128xf32>
    %17 = arith.maximumf %15, %16 : vector<8x128xf32>
    %c8_i32 = arith.constant 8 : i32
    %18 = arith.muli %arg1, %c8_i32 : i32
    %19 = arith.index_cast %arg1 : i32 to index
    %20 = memref.load %arg2[%19] : memref<3xi32, #tpu.memory_space<smem>>
    %21 = arith.index_cast %arg1 : i32 to index
    %22 = memref.load %arg3[%21] : memref<3xi32, #tpu.memory_space<smem>>
    %23 = arith.cmpi eq, %20, %22 : i32
    %c8_i32_13 = arith.constant 8 : i32
    %24 = arith.addi %18, %c8_i32_13 : i32
    %c1_i32 = arith.constant 1 : i32
    %25 = arith.addi %20, %c1_i32 : i32
    %26 = arith.index_cast %25 : i32 to index
    %27 = memref.load %arg4[%26] : memref<3xi32, #tpu.memory_space<smem>>
    %28 = arith.cmpi sle, %24, %27 : i32
    %29 = arith.andi %23, %28 : i1
    %30 = arith.extui %29 : i1 to i32
    %c0_i32_14 = arith.constant 0 : i32
    %31 = arith.cmpi ne, %30, %c0_i32_14 : i32
    scf.if %31 {
      %cst_16 = arith.constant dense<0xFF800000> : vector<128xf32>
      %35 = vector.multi_reduction <maximumf>, %17, %cst_16 [0] : vector<8x128xf32> to vector<128xf32>
      %36 = vector.shape_cast %35 : vector<128xf32> to vector<1x128xf32>
      %37 = arith.index_cast %20 : i32 to index
      %c0_17 = arith.constant 0 : index
      %38 = vector.load %arg10[%37, %c0_17] : memref<8x128xf32, #tpu.memory_space<vmem>>, vector<1x128xf32>
      %39 = arith.maximumf %38, %36 : vector<1x128xf32>
      %40 = arith.index_cast %20 : i32 to index
      %c0_18 = arith.constant 0 : index
      %41 = vector.load %arg10[%40, %c0_18] : memref<8x128xf32, #tpu.memory_space<vmem>>, vector<1x128xf32>
      tpu.vector_store %arg10[%40, %c0_18], %39 {strides = array<i32>} : memref<8x128xf32, #tpu.memory_space<vmem>>, vector<1x128xf32>,
    } else {
    }
    %true = arith.constant true
    %32 = arith.xori %29, %true : i1
    %33 = arith.extui %32 : i1 to i32
    %c0_i32_15 = arith.constant 0 : i32
    %34 = arith.cmpi ne, %33, %c0_i32_15 : i32
    scf.if %34 {
      %35 = tpu.iota {dimensions = array<i32: 0>} : vector<8x1xi32>
      %36 = vector.broadcast %18 : i32 to vector<8x1xi32>
      %37 = arith.addi %35, %36 : vector<8x1xi32>
      %c1_i32_16 = arith.constant 1 : i32
      %38 = arith.addi %22, %c1_i32_16 : i32
      %c0_i32_17 = arith.constant 0 : i32
      %39 = arith.subi %38, %20 : i32
      %40 = arith.addi %20, %39 : i32
      %c1_i32_18 = arith.constant 1 : i32
      scf.for %arg11 = %20 to %40 step %c1_i32_18  : i32 {
        %41 = arith.index_cast %arg11 : i32 to index
        %42 = memref.load %arg4[%41] : memref<3xi32, #tpu.memory_space<smem>>
        %c1_i32_19 = arith.constant 1 : i32
        %43 = arith.addi %arg11, %c1_i32_19 : i32
        %44 = arith.index_cast %43 : i32 to index
        %45 = memref.load %arg4[%44] : memref<3xi32, #tpu.memory_space<smem>>
        %46 = vector.broadcast %42 : i32 to vector<8x1xi32>
        %47 = arith.cmpi sge, %37, %46 : vector<8x1xi32>
        %48 = vector.broadcast %45 : i32 to vector<8x1xi32>
        %49 = arith.cmpi slt, %37, %48 : vector<8x1xi32>
        %50 = arith.andi %47, %49 : vector<8x1xi1>
        %cst_20 = arith.constant 0.000000e+00 : f32
        %51 = vector.shape_cast %50 : vector<8x1xi1> to vector<8x1xi1>
        %52 = vector.broadcast %51 : vector<8x1xi1> to vector<8x128xi1>
        %53 = vector.broadcast %cst_20 : f32 to vector<8x128xf32>
        %54 = arith.select %52, %17, %53 : vector<8x128xi1>, vector<8x128xf32>
        %cst_21 = arith.constant dense<0xFF800000> : vector<128xf32>
        %55 = vector.multi_reduction <maximumf>, %54, %cst_21 [0] : vector<8x128xf32> to vector<128xf32>
        %56 = vector.shape_cast %55 : vector<128xf32> to vector<1x128xf32>
        %57 = arith.index_cast %arg11 : i32 to index
        %c0_22 = arith.constant 0 : index
        %58 = vector.load %arg10[%57, %c0_22] : memref<8x128xf32, #tpu.memory_space<vmem>>, vector<1x128xf32>
        %59 = arith.maximumf %58, %56 : vector<1x128xf32>
        %60 = arith.index_cast %arg11 : i32 to index
        %c0_23 = arith.constant 0 : index
        %61 = vector.load %arg10[%60, %c0_23] : memref<8x128xf32, #tpu.memory_space<vmem>>, vector<1x128xf32>
        tpu.vector_store %arg10[%60, %c0_23], %59 {strides = array<i32>} : memref<8x128xf32, #tpu.memory_space<vmem>>, vector<1x128xf32>,
      }
    } else {
    }
    return
  }
  func.func @transform_0(%arg0: i32, %arg1: i32, %arg2: memref<3xi32, #tpu.memory_space<smem>>, %arg3: memref<3xi32, #tpu.memory_space<smem>>, %arg4: memref<3xi32, #tpu.memory_space<smem>>) -> (i32, i32) {
    %c0_i32 = arith.constant 0 : i32
    %c0_i32_0 = arith.constant 0 : i32
    return %arg1, %c0_i32 : i32, i32
  }
  func.func @transform_1(%arg0: i32, %arg1: i32, %arg2: memref<3xi32, #tpu.memory_space<smem>>, %arg3: memref<3xi32, #tpu.memory_space<smem>>, %arg4: memref<3xi32, #tpu.memory_space<smem>>) -> (i32, i32) {
    %c0_i32 = arith.constant 0 : i32
    %c0_i32_0 = arith.constant 0 : i32
    %c0_i32_1 = arith.constant 0 : i32
    return %c0_i32, %c0_i32_0 : i32, i32
  }
  func.func @transform_2(%arg0: i32, %arg1: i32, %arg2: memref<3xi32, #tpu.memory_space<smem>>, %arg3: memref<3xi32, #tpu.memory_space<smem>>, %arg4: memref<3xi32, #tpu.memory_space<smem>>) -> (i32, i32) {
    %c0_i32 = arith.constant 0 : i32
    %c0_i32_0 = arith.constant 0 : i32
    %c0_i32_1 = arith.constant 0 : i32
    return %c0_i32, %c0_i32_0 : i32, i32
  }
  func.func @transform_3(%arg0: i32, %arg1: i32, %arg2: memref<3xi32, #tpu.memory_space<smem>>, %arg3: memref<3xi32, #tpu.memory_space<smem>>, %arg4: memref<3xi32, #tpu.memory_space<smem>>) -> (i32, i32) {
    %c0_i32 = arith.constant 0 : i32
    %c0_i32_0 = arith.constant 0 : i32
    return %c0_i32, %arg0 : i32, i32
  }
  func.func @transform_4(%arg0: i32, %arg1: i32, %arg2: memref<3xi32, #tpu.memory_space<smem>>, %arg3: memref<3xi32, #tpu.memory_space<smem>>, %arg4: memref<3xi32, #tpu.memory_space<smem>>) -> (i32, i32) {
    %c0_i32 = arith.constant 0 : i32
    %c0_i32_0 = arith.constant 0 : i32
    return %c0_i32, %arg0 : i32, i32
  }
  func.func @transform_5(%arg0: i32, %arg1: i32, %arg2: memref<3xi32, #tpu.memory_space<smem>>, %arg3: memref<3xi32, #tpu.memory_space<smem>>, %arg4: memref<3xi32, #tpu.memory_space<smem>>) -> (i32, i32) {
    %c0_i32 = arith.constant 0 : i32
    %c0_i32_0 = arith.constant 0 : i32
    return %c0_i32, %arg0 : i32, i32
  }
}

module attributes {stable_mosaic.version = 11 : i64} {
  func.func @_global_sa_kernel(%arg0: i32, %arg1: i32, %arg2: memref<3xi32, #tpu.memory_space<smem>>, %arg3: memref<3xi32, #tpu.memory_space<smem>>, %arg4: memref<3xi32, #tpu.memory_space<smem>>, %arg5: memref<8x16xf32, #tpu.memory_space<vmem>>, %arg6: memref<16x128xf32, #tpu.memory_space<vmem>>, %arg7: memref<1x128xf32, #tpu.memory_space<vmem>>, %arg8: memref<128x128xf32, #tpu.memory_space<vmem>>, %arg9: memref<1x128xf32, #tpu.memory_space<vmem>>, %arg10: memref<8x128xf32, #tpu.memory_space<vmem>>) attributes {dimension_semantics = [#tpu.dimension_semantics<parallel>, #tpu.dimension_semantics<arbitrary>], iteration_bounds = array<i64: 1, 3>, scalar_prefetch = 3 : i64, scratch_operands = 0 : i64, tpu.core_type = #tpu.core_type<tc>, window_params = [{transform_indices = @transform_0, window_bounds = array<i64: 8, 16>}, {pipeline_mode = #tpu.pipeline_mode<synchronous>, transform_indices = @transform_1, window_bounds = array<i64: 16, 128>}, {pipeline_mode = #tpu.pipeline_mode<synchronous>, transform_indices = @transform_2, window_bounds = array<i64: 1, 128>}, {transform_indices = @transform_3, window_bounds = array<i64: 128, 128>}, {transform_indices = @transform_4, window_bounds = array<i64: 1, 128>}, {transform_indices = @transform_5, window_bounds = array<i64: 8, 128>}]} {
    %c0_i32 = arith.constant 0 : i32
    %0 = arith.cmpi eq, %arg1, %c0_i32 : i32
    %1 = arith.extui %0 : i1 to i32
    %c0_i32_0 = arith.constant 0 : i32
    %2 = arith.cmpi ne, %1, %c0_i32_0 : i32
    scf.if %2 {
      %cst_16 = arith.constant 0.000000e+00 : f32
      %35 = vector.broadcast %cst_16 : f32 to vector<8x128xf32>
      %c0_17 = arith.constant 0 : index
      %c0_18 = arith.constant 0 : index
      %36 = vector.load %arg10[%c0_17, %c0_18] : memref<8x128xf32, #tpu.memory_space<vmem>>, vector<8x128xf32>
      tpu.vector_store %arg10[%c0_17, %c0_18], %35 {strides = array<i32>} : memref<8x128xf32, #tpu.memory_space<vmem>>, vector<8x128xf32>,
    } else {
    }
    %c0 = arith.constant 0 : index
    %c0_1 = arith.constant 0 : index
    %3 = vector.load %arg5[%c0, %c0_1] : memref<8x16xf32, #tpu.memory_space<vmem>>, vector<8x16xf32>
    %c0_2 = arith.constant 0 : index
    %c0_3 = arith.constant 0 : index
    %4 = vector.load %arg6[%c0_2, %c0_3] : memref<16x128xf32, #tpu.memory_space<vmem>>, vector<16x128xf32>
    %cst = arith.constant dense<0.000000e+00> : vector<8x128xf32>
    %5 = tpu.matmul %3, %4, %cst {dimension_numbers = #tpu.dot_dimension_numbers<[1], [0], [0], [1], [0, 0, 1, 1], [], []>} : vector<8x16xf32>, vector<16x128xf32>, vector<8x128xf32> -> vector<8x128xf32>
    %c0_4 = arith.constant 0 : index
    %c0_5 = arith.constant 0 : index
    %6 = vector.load %arg7[%c0_4, %c0_5] : memref<1x128xf32, #tpu.memory_space<vmem>>, vector<1x128xf32>
    %7 = vector.broadcast %6 : vector<1x128xf32> to vector<8x128xf32>
    %8 = arith.addf %5, %7 : vector<8x128xf32>
    %cst_6 = arith.constant 0.000000e+00 : f32
    %9 = vector.broadcast %cst_6 : f32 to vector<8x128xf32>
    %10 = arith.maximumf %8, %9 : vector<8x128xf32>
    %c0_7 = arith.constant 0 : index
    %c0_8 = arith.constant 0 : index
    %11 = vector.load %arg8[%c0_7, %c0_8] : memref<128x128xf32, #tpu.memory_space<vmem>>, vector<128x128xf32>
    %cst_9 = arith.constant dense<0.000000e+00> : vector<8x128xf32>
    %12 = tpu.matmul %10, %11, %cst_9 {dimension_numbers = #tpu.dot_dimension_numbers<[1], [0], [0], [1], [0, 0, 1, 1], [], []>} : vector<8x128xf32>, vector<128x128xf32>, vector<8x128xf32> -> vector<8x128xf32>
    %c0_10 = arith.constant 0 : index
    %c0_11 = arith.constant 0 : index
    %13 = vector.load %arg9[%c0_10, %c0_11] : memref<1x128xf32, #tpu.memory_space<vmem>>, vector<1x128xf32>
    %14 = vector.broadcast %13 : vector<1x128xf32> to vector<8x128xf32>
    %15 = arith.addf %12, %14 : vector<8x128xf32>
    %cst_12 = arith.constant 0.000000e+00 : f32
    %16 = vector.broadcast %cst_12 : f32 to vector<8x128xf32>
    %17 = arith.maximumf %15, %16 : vector<8x128xf32>
    %c8_i32 = arith.constant 8 : i32
    %18 = arith.muli %arg1, %c8_i32 : i32
    %19 = arith.index_cast %arg1 : i32 to index
    %20 = memref.load %arg2[%19] : memref<3xi32, #tpu.memory_space<smem>>
    %21 = arith.index_cast %arg1 : i32 to index
    %22 = memref.load %arg3[%21] : memref<3xi32, #tpu.memory_space<smem>>
    %23 = arith.cmpi eq, %20, %22 : i32
    %c8_i32_13 = arith.constant 8 : i32
    %24 = arith.addi %18, %c8_i32_13 : i32
    %c1_i32 = arith.constant 1 : i32
    %25 = arith.addi %20, %c1_i32 : i32
    %26 = arith.index_cast %25 : i32 to index
    %27 = memref.load %arg4[%26] : memref<3xi32, #tpu.memory_space<smem>>
    %28 = arith.cmpi sle, %24, %27 : i32
    %29 = arith.andi %23, %28 : i1
    %30 = arith.extui %29 : i1 to i32
    %c0_i32_14 = arith.constant 0 : i32
    %31 = arith.cmpi ne, %30, %c0_i32_14 : i32
    scf.if %31 {
      %cst_16 = arith.constant dense<0xFF800000> : vector<128xf32>
      %35 = vector.multi_reduction <maximumf>, %17, %cst_16 [0] : vector<8x128xf32> to vector<128xf32>
      %36 = vector.shape_cast %35 : vector<128xf32> to vector<1x128xf32>
      %37 = arith.index_cast %20 : i32 to index
      %c0_17 = arith.constant 0 : index
      %38 = vector.load %arg10[%37, %c0_17] : memref<8x128xf32, #tpu.memory_space<vmem>>, vector<1x128xf32>
      %39 = arith.maximumf %38, %36 : vector<1x128xf32>
      %40 = arith.index_cast %20 : i32 to index
      %c0_18 = arith.constant 0 : index
      %41 = vector.load %arg10[%40, %c0_18] : memref<8x128xf32, #tpu.memory_space<vmem>>, vector<1x128xf32>
      tpu.vector_store %arg10[%40, %c0_18], %39 {strides = array<i32>} : memref<8x128xf32, #tpu.memory_space<vmem>>, vector<1x128xf32>,
    } else {
    }
    %true = arith.constant true
    %32 = arith.xori %29, %true : i1
    %33 = arith.extui %32 : i1 to i32
    %c0_i32_15 = arith.constant 0 : i32
    %34 = arith.cmpi ne, %33, %c0_i32_15 : i32
    scf.if %34 {
      %35 = tpu.iota {dimensions = array<i32: 0>} : vector<8x1xi32>
      %36 = vector.broadcast %18 : i32 to vector<8x1xi32>
      %37 = arith.addi %35, %36 : vector<8x1xi32>
      %c1_i32_16 = arith.constant 1 : i32
      %38 = arith.addi %22, %c1_i32_16 : i32
      %c0_i32_17 = arith.constant 0 : i32
      %39 = arith.subi %38, %20 : i32
      %40 = arith.addi %20, %39 : i32
      %c1_i32_18 = arith.constant 1 : i32
      scf.for %arg11 = %20 to %40 step %c1_i32_18  : i32 {
        %41 = arith.index_cast %arg11 : i32 to index
        %42 = memref.load %arg4[%41] : memref<3xi32, #tpu.memory_space<smem>>
        %c1_i32_19 = arith.constant 1 : i32
        %43 = arith.addi %arg11, %c1_i32_19 : i32
        %44 = arith.index_cast %43 : i32 to index
        %45 = memref.load %arg4[%44] : memref<3xi32, #tpu.memory_space<smem>>
        %46 = vector.broadcast %42 : i32 to vector<8x1xi32>
        %47 = arith.cmpi sge, %37, %46 : vector<8x1xi32>
        %48 = vector.broadcast %45 : i32 to vector<8x1xi32>
        %49 = arith.cmpi slt, %37, %48 : vector<8x1xi32>
        %50 = arith.andi %47, %49 : vector<8x1xi1>
        %cst_20 = arith.constant 0.000000e+00 : f32
        %51 = vector.shape_cast %50 : vector<8x1xi1> to vector<8x1xi1>
        %52 = vector.broadcast %51 : vector<8x1xi1> to vector<8x128xi1>
        %53 = vector.broadcast %cst_20 : f32 to vector<8x128xf32>
        %54 = arith.select %52, %17, %53 : vector<8x128xi1>, vector<8x128xf32>
        %cst_21 = arith.constant dense<0xFF800000> : vector<128xf32>
        %55 = vector.multi_reduction <maximumf>, %54, %cst_21 [0] : vector<8x128xf32> to vector<128xf32>
        %56 = vector.shape_cast %55 : vector<128xf32> to vector<1x128xf32>
        %57 = arith.index_cast %arg11 : i32 to index
        %c0_22 = arith.constant 0 : index
        %58 = vector.load %arg10[%57, %c0_22] : memref<8x128xf32, #tpu.memory_space<vmem>>, vector<1x128xf32>
        %59 = arith.maximumf %58, %56 : vector<1x128xf32>
        %60 = arith.index_cast %arg11 : i32 to index
        %c0_23 = arith.constant 0 : index
        %61 = vector.load %arg10[%60, %c0_23] : memref<8x128xf32, #tpu.memory_space<vmem>>, vector<1x128xf32>
        tpu.vector_store %arg10[%60, %c0_23], %59 {strides = array<i32>} : memref<8x128xf32, #tpu.memory_space<vmem>>, vector<1x128xf32>,
      }
    } else {
    }
    return
  }
  func.func @transform_0(%arg0: i32, %arg1: i32, %arg2: memref<3xi32, #tpu.memory_space<smem>>, %arg3: memref<3xi32, #tpu.memory_space<smem>>, %arg4: memref<3xi32, #tpu.memory_space<smem>>) -> (i32, i32) {
    %c0_i32 = arith.constant 0 : i32
    %c0_i32_0 = arith.constant 0 : i32
    return %arg1, %c0_i32 : i32, i32
  }
  func.func @transform_1(%arg0: i32, %arg1: i32, %arg2: memref<3xi32, #tpu.memory_space<smem>>, %arg3: memref<3xi32, #tpu.memory_space<smem>>, %arg4: memref<3xi32, #tpu.memory_space<smem>>) -> (i32, i32) {
    %c0_i32 = arith.constant 0 : i32
    %c0_i32_0 = arith.constant 0 : i32
    %c0_i32_1 = arith.constant 0 : i32
    return %c0_i32, %c0_i32_0 : i32, i32
  }
  func.func @transform_2(%arg0: i32, %arg1: i32, %arg2: memref<3xi32, #tpu.memory_space<smem>>, %arg3: memref<3xi32, #tpu.memory_space<smem>>, %arg4: memref<3xi32, #tpu.memory_space<smem>>) -> (i32, i32) {
    %c0_i32 = arith.constant 0 : i32
    %c0_i32_0 = arith.constant 0 : i32
    %c0_i32_1 = arith.constant 0 : i32
    return %c0_i32, %c0_i32_0 : i32, i32
  }
  func.func @transform_3(%arg0: i32, %arg1: i32, %arg2: memref<3xi32, #tpu.memory_space<smem>>, %arg3: memref<3xi32, #tpu.memory_space<smem>>, %arg4: memref<3xi32, #tpu.memory_space<smem>>) -> (i32, i32) {
    %c0_i32 = arith.constant 0 : i32
    %c0_i32_0 = arith.constant 0 : i32
    return %c0_i32, %arg0 : i32, i32
  }
  func.func @transform_4(%arg0: i32, %arg1: i32, %arg2: memref<3xi32, #tpu.memory_space<smem>>, %arg3: memref<3xi32, #tpu.memory_space<smem>>, %arg4: memref<3xi32, #tpu.memory_space<smem>>) -> (i32, i32) {
    %c0_i32 = arith.constant 0 : i32
    %c0_i32_0 = arith.constant 0 : i32
    return %c0_i32, %arg0 : i32, i32
  }
  func.func @transform_5(%arg0: i32, %arg1: i32, %arg2: memref<3xi32, #tpu.memory_space<smem>>, %arg3: memref<3xi32, #tpu.memory_space<smem>>, %arg4: memref<3xi32, #tpu.memory_space<smem>>) -> (i32, i32) {
    %c0_i32 = arith.constant 0 : i32
    %c0_i32_0 = arith.constant 0 : i32
    return %c0_i32, %arg0 : i32, i32
  }
}

</mosaic_0001>

<llo_original>
// kernel: tpu_custom_call.1
$region0: #{tpu_custom_call.1}
  #allocation0 [shape = 'u32[]', space=smem, size = 0x4, offset = 0x4, fixed_abs, tag = 'smem constant byte address 0x4 - core index']
  #allocation1 [shape = 'u32[72,128]{1,0:T(1,128)}', space=vmem, size = 0x9000, scoped, tag = 'internal scratch']
  #allocation2 [shape = 's32[1]{0}', space=sflag, size = 0x4, scoped, tag = 'scoped memory for tpu_custom_call.1']
  #allocation3 [shape = 'u8[512]{0}', space=smem, size = 0x200, scoped, tag = 'prefetched SMEM operand 0']
  #allocation4 [shape = 'u8[512]{0}', space=smem, size = 0x200, scoped, tag = 'prefetched SMEM operand 1']
  #allocation5 [shape = 'u8[512]{0}', space=smem, size = 0x200, scoped, tag = 'prefetched SMEM operand 2']
  %s0 = inlined_call_operand.vmem [shape: s32[3], index: 0, kind: input, shape index: {}]
  %s1 = inlined_call_operand.vmem [shape: s32[3], index: 1, kind: input, shape index: {}]
  %s2 = inlined_call_operand.vmem [shape: s32[3], index: 2, kind: input, shape index: {}]
  %s3 = inlined_call_operand.vmem [shape: f32[24,16], index: 3, kind: input, shape index: {}]
  %s4 = inlined_call_operand.vmem [shape: f32[16,128], index: 4, kind: input, shape index: {}]
  %s5 = inlined_call_operand.vmem [shape: f32[1,128], index: 5, kind: input, shape index: {}]
  %s6 = inlined_call_operand.hbm [shape: f32[128,128], index: 6, kind: input, shape index: {}]
  %s7 = inlined_call_operand.vmem [shape: f32[1,128], index: 7, kind: input, shape index: {}]
  %s8 = inlined_call_operand.hbm [shape: f32[8,128], index: 8, kind: output, shape index: {}]
  %s9 = sld [smem:[#allocation0]]
  $region76: #{tpu_custom_call.1} parent=0
    _
  %s11 = ssub.s32 1, %s9
  %s12 = scalar_select 0, %s11, %s9
  %s14 = sshll.u32 %s0, 4
  %s15 = int_to_ptr.vmem [resolvable:$true] %s14
  %17 = dma.vmem_to_smem %s15, 16, [#allocation3], [#allocation2]
  %s19 = sshll.u32 %s1, 4
  %s20 = int_to_ptr.vmem [resolvable:$true] %s19
  %22 = dma.vmem_to_smem %s20, 16, [#allocation4], [#allocation2]
  %s24 = sshll.u32 %s2, 4
  %s25 = int_to_ptr.vmem [resolvable:$true] %s24
  %27 = dma.vmem_to_smem %s25, 16, [#allocation5], [#allocation2]
  %29 = dma.done [#allocation2], 48
  %30 = sfence
  $region1: #{tpu_custom_call.1} parent=0
    #allocation6 [shape = 'u8[65536]{0}', space=vmem, size = 0x10000, scoped, tag = 'input window, operand 6, single buffered']
    #allocation7 [shape = 's32[2]{0}', space=sflag, size = 0x8, scoped, tag = 'scoped memory for tpu_custom_call.1']
    #allocation8 [shape = 's32[2]{0}', space=sflag, size = 0x8, scoped, tag = 'scoped memory for tpu_custom_call.1']
    #allocation9 [shape = 'u8[4096]{0}', space=vmem, size = 0x1000, scoped, tag = 'output window, operand 0, single buffered']
    %31 = vsyncpa [#allocation7], 0
    %32 = vsyncpa [#allocation8], 0
    loop: start=0, step=1, limit=5
    $region2: #{tpu_custom_call.1} parent=1 // loop_pre_header
      _
    $region3: #{tpu_custom_call.1} parent=1 // loop_header
      %s34 = sphi 0, %s38
      %p35 = scmp.ge.s32.totalorder %s34, 5
      %s41 = sphi 0, %s53
      %s42 = sphi 0, %s49
      %s43 = sphi 0, %s41
      %s44 = sphi 0, %s42
      %s45 = sphi 0, %s43
      %s46 = sphi 0, %s44
      %s56 = sphi 0, %s58
      %s59 = sphi 0, %s56
      %s60 = sphi 0, %s59
      %s76 = sphi 0, %s60
      %s80 = sphi 0, %s80
      %s82 = sphi 0, %s80
      %s83 = sphi 0, %s82
      %s97 = sphi 0, %s83
      %s101 = sphi 0, %s101
      %s103 = sphi 0, %s101
      %s104 = sphi 0, %s103
      %s118 = sphi 0, %s104
      %s124 = sphi 0, %s126
      %s127 = sphi 0, %s124
      %s128 = sphi 0, %s127
      %s144 = sphi 0, %s128
      %s150 = sphi 0, %s152
      %s153 = sphi 0, %s150
      %s154 = sphi 0, %s153
      %s170 = sphi 0, %s154
      %s176 = sphi 0, %s178
      %s179 = sphi 0, %s176
      %s180 = sphi 0, %s179
      %s196 = sphi 0, %s180
    $region4: #{tpu_custom_call.1} parent=1 // loop_header_branch
      %37 = sbr.rel (%p35) target = $region8
    $region5: #{tpu_custom_call.1} parent=1 // loop_body
      %s39 = ssub.s32 %s34, 1
      %s40 = ssub.s32 %s34, 2
      %s47 = sadd.s32 1, %s42
      %p48 = scmp.ge.s32.totalorder %s47, 3
      %s49 = scalar_select %p48, 0, %s47
      %s50 = sadd.s32 1, %s41
      %s51 = scalar_select %p48, %s50, %s41
      %p52 = scmp.ge.s32.totalorder %s51, 1
      %s53 = scalar_select %p52, 0, %s51
      %s54 = ssub.s32 %s42, %s49
      %p55 = scmp.eq.s32.totalorder %s54, 0
      %s57 = sadd.s32 %s56, 1
      %s58 = scalar_select %p55, %s56, %s57
      %p61 = pneg %p55
      %p62 = scmp.eq.s32.totalorder %s34, 2
      %p63 = por %p61, %p62
      %p64 = scmp.ne.s32.totalorder %s56, %s59
      %p65 = scmp.eq.s32.totalorder %s34, 0
      %p66 = por %p64, %p65
      %p67 = scmp.ne.s32.totalorder %s56, %s59
      %p68 = scmp.eq.s32.totalorder %s39, 2
      %p69 = por %p67, %p68
      %p70 = scmp.ne.s32.totalorder %s59, %s60
      %p71 = scmp.eq.s32.totalorder %s39, 0
      %p72 = por %p70, %p71
      %p73 = scmp.ne.s32.totalorder %s59, %s60
      %p74 = scmp.eq.s32.totalorder %s40, 2
      %p75 = por %p73, %p74
      %p77 = scmp.ne.s32.totalorder %s60, %s76
      %p78 = scmp.eq.s32.totalorder %s40, 0
      %p79 = por %p77, %p78
      %s81 = sadd.s32 %s80, 1
      %p84 = scmp.eq.s32.totalorder %s34, 2
      %p85 = scmp.ne.s32.totalorder %s80, %s82
      %p86 = scmp.eq.s32.totalorder %s34, 0
      %p87 = por %p85, %p86
      %p88 = scmp.ne.s32.totalorder %s80, %s82
      %p89 = scmp.eq.s32.totalorder %s39, 2
      %p90 = por %p88, %p89
      %p91 = scmp.ne.s32.totalorder %s82, %s83
      %p92 = scmp.eq.s32.totalorder %s39, 0
      %p93 = por %p91, %p92
      %p94 = scmp.ne.s32.totalorder %s82, %s83
      %p95 = scmp.eq.s32.totalorder %s40, 2
      %p96 = por %p94, %p95
      %p98 = scmp.ne.s32.totalorder %s83, %s97
      %p99 = scmp.eq.s32.totalorder %s40, 0
      %p100 = por %p98, %p99
      %s102 = sadd.s32 %s101, 1
      %p105 = scmp.eq.s32.totalorder %s34, 2
      %p106 = scmp.ne.s32.totalorder %s101, %s103
      %p107 = scmp.eq.s32.totalorder %s34, 0
      %p108 = por %p106, %p107
      %p109 = scmp.ne.s32.totalorder %s101, %s103
      %p110 = scmp.eq.s32.totalorder %s39, 2
      %p111 = por %p109, %p110
      %p112 = scmp.ne.s32.totalorder %s103, %s104
      %p113 = scmp.eq.s32.totalorder %s39, 0
      %p114 = por %p112, %p113
      %p115 = scmp.ne.s32.totalorder %s103, %s104
      %p116 = scmp.eq.s32.totalorder %s40, 2
      %p117 = por %p115, %p116
      %p119 = scmp.ne.s32.totalorder %s104, %s118
      %p120 = scmp.eq.s32.totalorder %s40, 0
      %p121 = por %p119, %p120
      %s122 = ssub.s32 %s41, %s53
      %p123 = scmp.eq.s32.totalorder %s122, 0
      %s125 = sadd.s32 %s124, 1
      %s126 = scalar_select %p123, %s124, %s125
      %p129 = pneg %p123
      %p130 = scmp.eq.s32.totalorder %s34, 2
      %p131 = por %p129, %p130
      %p132 = scmp.ne.s32.totalorder %s124, %s127
      %p133 = scmp.eq.s32.totalorder %s34, 0
      %p134 = por %p132, %p133
      %p135 = scmp.ne.s32.totalorder %s124, %s127
      %p136 = scmp.eq.s32.totalorder %s39, 2
      %p137 = por %p135, %p136
      %p138 = scmp.ne.s32.totalorder %s127, %s128
      %p139 = scmp.eq.s32.totalorder %s39, 0
      %p140 = por %p138, %p139
      %p141 = scmp.ne.s32.totalorder %s127, %s128
      %p142 = scmp.eq.s32.totalorder %s40, 2
      %p143 = por %p141, %p142
      %p145 = scmp.ne.s32.totalorder %s128, %s144
      %p146 = scmp.eq.s32.totalorder %s40, 0
      %p147 = por %p145, %p146
      %s148 = ssub.s32 %s41, %s53
      %p149 = scmp.eq.s32.totalorder %s148, 0
      %s151 = sadd.s32 %s150, 1
      %s152 = scalar_select %p149, %s150, %s151
      %p155 = pneg %p149
      %p156 = scmp.eq.s32.totalorder %s34, 2
      %p157 = por %p155, %p156
      %p158 = scmp.ne.s32.totalorder %s150, %s153
      %p159 = scmp.eq.s32.totalorder %s34, 0
      %p160 = por %p158, %p159
      %p161 = scmp.ne.s32.totalorder %s150, %s153
      %p162 = scmp.eq.s32.totalorder %s39, 2
      %p163 = por %p161, %p162
      %p164 = scmp.ne.s32.totalorder %s153, %s154
      %p165 = scmp.eq.s32.totalorder %s39, 0
      %p166 = por %p164, %p165
      %p167 = scmp.ne.s32.totalorder %s153, %s154
      %p168 = scmp.eq.s32.totalorder %s40, 2
      %p169 = por %p167, %p168
      %p171 = scmp.ne.s32.totalorder %s154, %s170
      %p172 = scmp.eq.s32.totalorder %s40, 0
      %p173 = por %p171, %p172
      %s174 = ssub.s32 %s41, %s53
      %p175 = scmp.eq.s32.totalorder %s174, 0
      %s177 = sadd.s32 %s176, 1
      %s178 = scalar_select %p175, %s176, %s177
      %p181 = pneg %p175
      %p182 = scmp.eq.s32.totalorder %s34, 2
      %p183 = por %p181, %p182
      %p184 = scmp.ne.s32.totalorder %s176, %s179
      %p185 = scmp.eq.s32.totalorder %s34, 0
      %p186 = por %p184, %p185
      %p187 = scmp.ne.s32.totalorder %s176, %s179
      %p188 = scmp.eq.s32.totalorder %s39, 2
      %p189 = por %p187, %p188
      %p190 = scmp.ne.s32.totalorder %s179, %s180
      %p191 = scmp.eq.s32.totalorder %s39, 0
      %p192 = por %p190, %p191
      %p193 = scmp.ne.s32.totalorder %s179, %s180
      %p194 = scmp.eq.s32.totalorder %s40, 2
      %p195 = por %p193, %p194
      %p197 = scmp.ne.s32.totalorder %s180, %s196
      %p198 = scmp.eq.s32.totalorder %s40, 0
      %p199 = por %p197, %p198
      %p200 = scmp.le.s32.totalorder 1, %s34
      %p201 = scmp.lt.s32.totalorder %s34, 4
      %p202 = pnand %p200, %p201
      %p203 = pneg %p202
      // Predicated region
      $region9: #{tpu_custom_call.1} parent=5 // pred_check
        _
      $region10: #{tpu_custom_call.1} parent=5 // pred_check_branch
        %205 = sbr.rel (%p202) target = $region12
      $region11: #{tpu_custom_call.1} parent=5 // pred_region
        %s206 = ssub.s32 %s34, 1
        // Predicated region
        $region13: #{tpu_custom_call.1} parent=11 // pred_check
          %p207 = pneg %p93
        $region14: #{tpu_custom_call.1} parent=11 // pred_check_branch
          %209 = sbr.rel (%p207) target = $region16
        $region15: #{tpu_custom_call.1} parent=11 // pred_region
          _
        $region16: #{tpu_custom_call.1} parent=11 // pred_fallthru
          _
        // Predicated region
        $region17: #{tpu_custom_call.1} parent=11 // pred_check
          %p210 = pneg %p114
        $region18: #{tpu_custom_call.1} parent=11 // pred_check_branch
          %212 = sbr.rel (%p210) target = $region20
        $region19: #{tpu_custom_call.1} parent=11 // pred_region
          _
        $region20: #{tpu_custom_call.1} parent=11 // pred_fallthru
          _
        // Predicated region
        $region21: #{tpu_custom_call.1} parent=11 // pred_check
          %p213 = pneg %p140
        $region22: #{tpu_custom_call.1} parent=11 // pred_check_branch
          %215 = sbr.rel (%p213) target = $region24
        $region23: #{tpu_custom_call.1} parent=11 // pred_region
          %217 = vsyncadd [#allocation7], 0
          %s218 = smul.addr %s43, 8
          %s219 = scalar_lea.hbm %s6, %s218
          %s220 = sshll.u32 %s219, 4
          %s221 = int_to_ptr.hbm [resolvable:$true] %s220
          %s222 = sshll.u32 [#allocation6], 4
          %s223 = int_to_ptr.vmem [resolvable:$true] %s222
          %228 = dma.hbm_to_vmem [thread:$0]  %s221, 2048, %s223, [#allocation7], 128, 128, 8
        $region24: #{tpu_custom_call.1} parent=11 // pred_fallthru
          _
        // Predicated region
        $region25: #{tpu_custom_call.1} parent=11 // pred_check
          %p229 = pneg %p166
        $region26: #{tpu_custom_call.1} parent=11 // pred_check_branch
          %231 = sbr.rel (%p229) target = $region28
        $region27: #{tpu_custom_call.1} parent=11 // pred_region
          %p232 = scmp.lt.s32.totalorder %s43, 0
          %s233 = scalar_select %p232, %s43, 0
          %s234 = scalar_lea.vmem %s7, %s233
        $region28: #{tpu_custom_call.1} parent=11 // pred_fallthru
          _
      $region12: #{tpu_custom_call.1} parent=5 // pred_fallthru
        _
      %p235 = scmp.lt.s32.totalorder %s34, 3
      // Predicated region
      $region29: #{tpu_custom_call.1} parent=5 // pred_check
        %p236 = pneg %p235
      $region30: #{tpu_custom_call.1} parent=5 // pred_check_branch
        %238 = sbr.rel (%p236) target = $region32
      $region31: #{tpu_custom_call.1} parent=5 // pred_region
        // Predicated region
        $region33: #{tpu_custom_call.1} parent=31 // pred_check
          %p239 = pneg %p66
        $region34: #{tpu_custom_call.1} parent=31 // pred_check_branch
          %241 = sbr.rel (%p239) target = $region36
        $region35: #{tpu_custom_call.1} parent=31 // pred_region
          %p242 = scmp.lt.s32.totalorder %s42, 2
          %s243 = scalar_select %p242, %s42, 2
          %s244 = smul.addr %s243, 8
          %s245 = scalar_lea.vmem %s3, %s244
        $region36: #{tpu_custom_call.1} parent=31 // pred_fallthru
          _
      $region32: #{tpu_custom_call.1} parent=5 // pred_fallthru
        _
      %p246 = scmp.le.s32.totalorder 1, %s34
      %p247 = scmp.lt.s32.totalorder %s34, 4
      %p248 = pnand %p246, %p247
      %p249 = pneg %p248
      // Predicated region
      $region37: #{tpu_custom_call.1} parent=5 // pred_check
        _
      $region38: #{tpu_custom_call.1} parent=5 // pred_check_branch
        %251 = sbr.rel (%p248) target = $region40
      $region39: #{tpu_custom_call.1} parent=5 // pred_region
        %s252 = ssub.s32 %s34, 1
        // Predicated region
        $region41: #{tpu_custom_call.1} parent=39 // pred_check
          %p253 = pneg %p140
        $region42: #{tpu_custom_call.1} parent=39 // pred_check_branch
          %255 = sbr.rel (%p253) target = $region44
        $region43: #{tpu_custom_call.1} parent=39 // pred_region
          %257 = dma.done [#allocation7], 2048
        $region44: #{tpu_custom_call.1} parent=39 // pred_fallthru
          _
        %p258 = scmp.lt.s32.totalorder %s44, 2
        %s259 = scalar_select %p258, %s44, 2
        %s260 = smul.addr %s259, 8
        %s261 = scalar_lea.vmem %s3, %s260
        %p262 = pneg %p72
        %p263 = pneg %p69
        %p264 = pneg %p93
        %p265 = pneg %p90
        %p266 = pneg %p114
        %p267 = pneg %p111
        %p268 = pneg %p140
        %p269 = pneg %p137
        %p270 = scmp.lt.s32.totalorder %s43, 0
        %s271 = scalar_select %p270, %s43, 0
        %s272 = scalar_lea.vmem %s7, %s271
        %p273 = pneg %p166
        %p274 = pneg %p163
        %p275 = pneg %p192
        %p276 = pneg %p189
        %p277 = scmp.lt.s32.totalorder %s44, 2
        %s278 = scalar_select %p277, %s44, 2
        %s279 = smul.addr %s278, 8
        %s280 = scalar_lea.vmem %s3, %s279
        %p281 = scmp.lt.s32.totalorder %s43, 0
        %s282 = scalar_select %p281, %s43, 0
        %s283 = scalar_lea.vmem %s7, %s282
        %p284 = scmp.eq.s32.totalorder %s44, 0
        // Predicated region
        $region45: #{tpu_custom_call.1} parent=39 // pred_check
          %p285 = pneg %p284
        $region46: #{tpu_custom_call.1} parent=39 // pred_check_branch
          %287 = sbr.rel (%p285) target = $region48
        $region47: #{tpu_custom_call.1} parent=39 // pred_region
          %288 = vst [vmem:[#allocation9] sm:$0xff] 0.0
        $region48: #{tpu_custom_call.1} parent=39 // pred_fallthru
          _
        %v289 = vld [vmem:[%s280] sm:$0xff]
        %v290 = vld [vmem:[%s4] sm:$0xff]
        %v291 = vld [vmem:[%s4 + $0x8] sm:$0xff]
        %v292 = vld [vmem:[%s5] sm:$0x1]
        %v294 = vperm.slane %v292, 0
        %vm296 = vcmask 130048
        %v298 = vsel %vm296, %v289, 0
        %300 = vmatpush.msra.mxu0 0.0
        %301 = vmatpush.msra.mxu0 0.0
        %302 = vmatpush.msra.mxu0 0.0
        %303 = vmatpush.msra.mxu0 0.0
        %304 = vmatpush.msra.mxu0 0.0
        %305 = vmatpush.msra.mxu0 0.0
        %306 = vmatpush.msra.mxu0 0.0
        %307 = vmatpush.msra.mxu0 0.0
        %308 = vmatpush.msra.mxu0 0.0
        %309 = vmatpush.msra.mxu0 0.0
        %310 = vmatpush.msra.mxu0 0.0
        %311 = vmatpush.msra.mxu0 0.0
        %312 = vmatpush.msra.mxu0 0.0
        %313 = vmatpush.msra.mxu0 0.0
        %314 = vmatpush.msra.mxu0 %v291
        %315 = vmatpush.msra.mxu0 %v290
        %316 = vmatmul.f32.gmra.mxu0 %v298
        %v317 = vpop.f32.mrf.mxu0
        %v318 = vadd.f32 %v294, %v317
        %319 = vdwg.mxu0
        %v320 = vmax.f32 %v318, 0.0
        %v321 = vld [vmem:[#allocation6] sm:$0xff]
        %v322 = vld [vmem:[#allocation6 + $0x8] sm:$0xff]
        %v323 = vld [vmem:[#allocation6 + $0x10] sm:$0xff]
        %v324 = vld [vmem:[#allocation6 + $0x18] sm:$0xff]
        %v325 = vld [vmem:[#allocation6 + $0x20] sm:$0xff]
        %v326 = vld [vmem:[#allocation6 + $0x28] sm:$0xff]
        %v327 = vld [vmem:[#allocation6 + $0x30] sm:$0xff]
        %v328 = vld [vmem:[#allocation6 + $0x38] sm:$0xff]
        %v329 = vld [vmem:[#allocation6 + $0x40] sm:$0xff]
        %v330 = vld [vmem:[#allocation6 + $0x48] sm:$0xff]
        %v331 = vld [vmem:[#allocation6 + $0x50] sm:$0xff]
        %v332 = vld [vmem:[#allocation6 + $0x58] sm:$0xff]
        %v333 = vld [vmem:[#allocation6 + $0x60] sm:$0xff]
        %v334 = vld [vmem:[#allocation6 + $0x68] sm:$0xff]
        %v335 = vld [vmem:[#allocation6 + $0x70] sm:$0xff]
        %v336 = vld [vmem:[#allocation6 + $0x78] sm:$0xff]
        %v337 = vld [vmem:[%s283] sm:$0x1]
        %v339 = vperm.slane %v337, 0
        %341 = vmatpush.msra.mxu0 %v336
        %342 = vmatpush.msra.mxu0 %v335
        %343 = vmatpush.msra.mxu0 %v334
        %344 = vmatpush.msra.mxu0 %v333
        %345 = vmatpush.msra.mxu0 %v332
        %346 = vmatpush.msra.mxu0 %v331
        %347 = vmatpush.msra.mxu0 %v330
        %348 = vmatpush.msra.mxu0 %v329
        %349 = vmatpush.msra.mxu0 %v328
        %350 = vmatpush.msra.mxu0 %v327
        %351 = vmatpush.msra.mxu0 %v326
        %352 = vmatpush.msra.mxu0 %v325
        %353 = vmatpush.msra.mxu0 %v324
        %354 = vmatpush.msra.mxu0 %v323
        %355 = vmatpush.msra.mxu0 %v322
        %356 = vmatpush.msra.mxu0 %v321
        %357 = vmatmul.f32.gmra.mxu0 %v320
        %v358 = vpop.f32.mrf.mxu0
        %v359 = vadd.f32 %v339, %v358
        %360 = vdwg.mxu0
        %v361 = vmax.f32 %v359, 0.0
        %s362 = smul.u32 %s44, 8
        %s363 = sld [smem:[#allocation3 + %s44]]
        %s364 = sld [smem:[#allocation4 + %s44]]
        %p365 = scmp.eq.s32.totalorder %s363, %s364
        %s366 = sadd.s32 %s362, 8
        %s367 = sadd.s32 %s363, 1
        %s368 = sld [smem:[#allocation5 + %s367]]
        %p369 = scmp.le.s32.totalorder %s366, %s368
        %p370 = pnand %p365, %p369
        %p371 = pneg %p370
        // Predicated region
        $region49: #{tpu_custom_call.1} parent=39 // pred_check
          _
        $region50: #{tpu_custom_call.1} parent=39 // pred_check_branch
          %373 = sbr.rel (%p370) target = $region52
        $region51: #{tpu_custom_call.1} parent=39 // pred_region
          %v374 = vrot.slane %v361, 4
          %v375 = vmax.f32 %v361, %v374
          %v376 = vrot.slane %v375, 2
          %v377 = vmax.f32 %v375, %v376
          %v378 = vrot.slane %v377, 1
          %v379 = vmax.f32 %v377, %v378
          %s380 = scalar_lea.vmem [#allocation9], %s363
          %v381 = vld [vmem:[%s380] sm:$0x1]
          %v382 = vmax.f32 %v381, %v379
          %383 = vst [vmem:[%s380] sm:$0x1] %v382
        $region52: #{tpu_custom_call.1} parent=39 // pred_fallthru
          _
        %p384 = pneg %p371
        // Predicated region
        $region53: #{tpu_custom_call.1} parent=39 // pred_check
          _
        $region54: #{tpu_custom_call.1} parent=39 // pred_check_branch
          %386 = sbr.rel (%p371) target = $region56
        $region55: #{tpu_custom_call.1} parent=39 // pred_region
          %v387 = vlaneseq
          %v388 = vshrl.u32 %v387, 7
          %v389 = vstv %s362
          %v390 = vadd.s32 %v388, %v389
          %s391 = sadd.s32 %s364, 1
          // While loop
          $region57: #{tpu_custom_call.1} parent=55 // loop_pre_header
            _
          $region58: #{tpu_custom_call.1} parent=55 // loop_header
            %s393 = sphi %s363, %s395
            %p394 = scmp.ge.s32.totalorder %s393, %s391
          $region59: #{tpu_custom_call.1} parent=55 // loop_header_branch
            %397 = sbr.rel (%p394) target = $region63
          $region60: #{tpu_custom_call.1} parent=55 // loop_body
            %s398 = sld [smem:[#allocation5 + %s393]]
            %s399 = sadd.s32 %s393, 1
            %s400 = sld [smem:[#allocation5 + %s399]]
            %v401 = vstv %s398
            %vm402 = vcmp.ge.s32.totalorder %v390, %v401
            %v403 = vstv %s400
            %vm404 = vcmp.lt.s32.totalorder %v390, %v403
            %vm405 = vmand %vm402, %vm404
            %v406 = vsel %vm405, 1, 0
            %vm407 = vcmp.eq.s32.totalorder %v406, 1
            %v408 = vsel %vm407, %v361, 0.0
            %v409 = vrot.slane %v408, 4
            %v410 = vmax.f32 %v408, %v409
            %v411 = vrot.slane %v410, 2
            %v412 = vmax.f32 %v410, %v411
            %v413 = vrot.slane %v412, 1
            %v414 = vmax.f32 %v412, %v413
            %s415 = scalar_lea.vmem [#allocation9], %s393
            %v416 = vld [vmem:[%s415] sm:$0x1]
            %v417 = vmax.f32 %v416, %v414
            %418 = vst [vmem:[%s415] sm:$0x1] %v417
          $region61: #{tpu_custom_call.1} parent=55 // loop_footer
            %s395 = sadd.s32 %s393, 1
          $region62: #{tpu_custom_call.1} parent=55 // loop_footer_branch
            %392 = sbr.rel target = $region58
          $region63: #{tpu_custom_call.1} parent=55 // loop_exit
            _
        $region56: #{tpu_custom_call.1} parent=39 // pred_fallthru
          _
        // Predicated region
        $region64: #{tpu_custom_call.1} parent=39 // pred_check
          %p419 = pneg %p189
        $region65: #{tpu_custom_call.1} parent=39 // pred_check_branch
          %421 = sbr.rel (%p419) target = $region67
        $region66: #{tpu_custom_call.1} parent=39 // pred_region
          %423 = vsyncadd [#allocation8], 0
          %s424 = smul.addr %s43, 8
          %s425 = scalar_lea.hbm %s8, %s424
          %s427 = sshll.u32 [#allocation9], 4
          %s428 = int_to_ptr.vmem [resolvable:$true] %s427
          %s429 = sshll.u32 %s425, 4
          %s430 = int_to_ptr.hbm [resolvable:$true] %s429
          %432 = dma.vmem_to_hbm [thread:$0]  %s428, 128, %s430, [#allocation8]
        $region67: #{tpu_custom_call.1} parent=39 // pred_fallthru
          _
        // Predicated region
        $region68: #{tpu_custom_call.1} parent=39 // pred_check
          %p433 = pneg %p189
        $region69: #{tpu_custom_call.1} parent=39 // pred_check_branch
          %435 = sbr.rel (%p433) target = $region71
        $region70: #{tpu_custom_call.1} parent=39 // pred_region
          %437 = dma.done [#allocation8], 128
        $region71: #{tpu_custom_call.1} parent=39 // pred_fallthru
          _
      $region40: #{tpu_custom_call.1} parent=5 // pred_fallthru
        _
      %p438 = scmp.le.s32.totalorder 2, %s34
      // Predicated region
      $region72: #{tpu_custom_call.1} parent=5 // pred_check
        %p439 = pneg %p438
      $region73: #{tpu_custom_call.1} parent=5 // pred_check_branch
        %441 = sbr.rel (%p439) target = $region75
      $region74: #{tpu_custom_call.1} parent=5 // pred_region
        %s442 = ssub.s32 %s34, 2
      $region75: #{tpu_custom_call.1} parent=5 // pred_fallthru
        _
    $region6: #{tpu_custom_call.1} parent=1 // loop_footer
      %s38 = sadd.s32 1, %s34
    $region7: #{tpu_custom_call.1} parent=1 // loop_footer_branch
      %33 = sbr.rel target = $region3
    $region8: #{tpu_custom_call.1} parent=1 // loop_exit
      _
    %443 = vsyncpa [#allocation7], 1
    %s444 = scalar_lea.sflag [#allocation7], 1
    %445 = vsyncpa %s444, 1
    %446 = vsyncpa [#allocation8], 1
    %s447 = scalar_lea.sflag [#allocation8], 1
    %448 = vsyncpa %s447, 1

// kernel: tpu_custom_call.1
$region0: #{tpu_custom_call.1}
  #allocation0 [shape = 'u32[]', space=smem, size = 0x4, offset = 0x4, fixed_abs, tag = 'smem constant byte address 0x4 - core index']
  #allocation1 [shape = 'u32[72,128]{1,0:T(1,128)}', space=vmem, size = 0x9000, scoped, tag = 'internal scratch']
  #allocation2 [shape = 's32[1]{0}', space=sflag, size = 0x4, scoped, tag = 'scoped memory for tpu_custom_call.1']
  #allocation3 [shape = 'u8[512]{0}', space=smem, size = 0x200, scoped, tag = 'prefetched SMEM operand 0']
  #allocation4 [shape = 'u8[512]{0}', space=smem, size = 0x200, scoped, tag = 'prefetched SMEM operand 1']
  #allocation5 [shape = 'u8[512]{0}', space=smem, size = 0x200, scoped, tag = 'prefetched SMEM operand 2']
  %s0 = inlined_call_operand.vmem [shape: s32[3], index: 0, kind: input, shape index: {}]
  %s1 = inlined_call_operand.vmem [shape: s32[3], index: 1, kind: input, shape index: {}]
  %s2 = inlined_call_operand.vmem [shape: s32[3], index: 2, kind: input, shape index: {}]
  %s3 = inlined_call_operand.vmem [shape: f32[24,16], index: 3, kind: input, shape index: {}]
  %s4 = inlined_call_operand.vmem [shape: f32[16,128], index: 4, kind: input, shape index: {}]
  %s5 = inlined_call_operand.vmem [shape: f32[1,128], index: 5, kind: input, shape index: {}]
  %s6 = inlined_call_operand.hbm [shape: f32[128,128], index: 6, kind: input, shape index: {}]
  %s7 = inlined_call_operand.vmem [shape: f32[1,128], index: 7, kind: input, shape index: {}]
  %s8 = inlined_call_operand.hbm [shape: f32[8,128], index: 8, kind: output, shape index: {}]
  %s9 = sld [smem:[#allocation0]]
  $region76: #{tpu_custom_call.1} parent=0
    _
  %s11 = ssub.s32 1, %s9
  %s12 = scalar_select 0, %s11, %s9
  %s14 = sshll.u32 %s0, 4
  %s15 = int_to_ptr.vmem [resolvable:$true] %s14
  %17 = dma.vmem_to_smem %s15, 16, [#allocation3], [#allocation2]
  %s19 = sshll.u32 %s1, 4
  %s20 = int_to_ptr.vmem [resolvable:$true] %s19
  %22 = dma.vmem_to_smem %s20, 16, [#allocation4], [#allocation2]
  %s24 = sshll.u32 %s2, 4
  %s25 = int_to_ptr.vmem [resolvable:$true] %s24
  %27 = dma.vmem_to_smem %s25, 16, [#allocation5], [#allocation2]
  %29 = dma.done [#allocation2], 48
  %30 = sfence
  $region1: #{tpu_custom_call.1} parent=0
    #allocation6 [shape = 'u8[65536]{0}', space=vmem, size = 0x10000, scoped, tag = 'input window, operand 6, single buffered']
    #allocation7 [shape = 's32[2]{0}', space=sflag, size = 0x8, scoped, tag = 'scoped memory for tpu_custom_call.1']
    #allocation8 [shape = 's32[2]{0}', space=sflag, size = 0x8, scoped, tag = 'scoped memory for tpu_custom_call.1']
    #allocation9 [shape = 'u8[4096]{0}', space=vmem, size = 0x1000, scoped, tag = 'output window, operand 0, single buffered']
    %31 = vsyncpa [#allocation7], 0
    %32 = vsyncpa [#allocation8], 0
    loop: start=0, step=1, limit=5
    $region2: #{tpu_custom_call.1} parent=1 // loop_pre_header
      _
    $region3: #{tpu_custom_call.1} parent=1 // loop_header
      %s34 = sphi 0, %s38
      %p35 = scmp.ge.s32.totalorder %s34, 5
      %s41 = sphi 0, %s53
      %s42 = sphi 0, %s49
      %s43 = sphi 0, %s41
      %s44 = sphi 0, %s42
      %s45 = sphi 0, %s43
      %s46 = sphi 0, %s44
      %s56 = sphi 0, %s58
      %s59 = sphi 0, %s56
      %s60 = sphi 0, %s59
      %s76 = sphi 0, %s60
      %s80 = sphi 0, %s80
      %s82 = sphi 0, %s80
      %s83 = sphi 0, %s82
      %s97 = sphi 0, %s83
      %s101 = sphi 0, %s101
      %s103 = sphi 0, %s101
      %s104 = sphi 0, %s103
      %s118 = sphi 0, %s104
      %s124 = sphi 0, %s126
      %s127 = sphi 0, %s124
      %s128 = sphi 0, %s127
      %s144 = sphi 0, %s128
      %s150 = sphi 0, %s152
      %s153 = sphi 0, %s150
      %s154 = sphi 0, %s153
      %s170 = sphi 0, %s154
      %s176 = sphi 0, %s178
      %s179 = sphi 0, %s176
      %s180 = sphi 0, %s179
      %s196 = sphi 0, %s180
    $region4: #{tpu_custom_call.1} parent=1 // loop_header_branch
      %37 = sbr.rel (%p35) target = $region8
    $region5: #{tpu_custom_call.1} parent=1 // loop_body
      %s39 = ssub.s32 %s34, 1
      %s40 = ssub.s32 %s34, 2
      %s47 = sadd.s32 1, %s42
      %p48 = scmp.ge.s32.totalorder %s47, 3
      %s49 = scalar_select %p48, 0, %s47
      %s50 = sadd.s32 1, %s41
      %s51 = scalar_select %p48, %s50, %s41
      %p52 = scmp.ge.s32.totalorder %s51, 1
      %s53 = scalar_select %p52, 0, %s51
      %s54 = ssub.s32 %s42, %s49
      %p55 = scmp.eq.s32.totalorder %s54, 0
      %s57 = sadd.s32 %s56, 1
      %s58 = scalar_select %p55, %s56, %s57
      %p61 = pneg %p55
      %p62 = scmp.eq.s32.totalorder %s34, 2
      %p63 = por %p61, %p62
      %p64 = scmp.ne.s32.totalorder %s56, %s59
      %p65 = scmp.eq.s32.totalorder %s34, 0
      %p66 = por %p64, %p65
      %p67 = scmp.ne.s32.totalorder %s56, %s59
      %p68 = scmp.eq.s32.totalorder %s39, 2
      %p69 = por %p67, %p68
      %p70 = scmp.ne.s32.totalorder %s59, %s60
      %p71 = scmp.eq.s32.totalorder %s39, 0
      %p72 = por %p70, %p71
      %p73 = scmp.ne.s32.totalorder %s59, %s60
      %p74 = scmp.eq.s32.totalorder %s40, 2
      %p75 = por %p73, %p74
      %p77 = scmp.ne.s32.totalorder %s60, %s76
      %p78 = scmp.eq.s32.totalorder %s40, 0
      %p79 = por %p77, %p78
      %s81 = sadd.s32 %s80, 1
      %p84 = scmp.eq.s32.totalorder %s34, 2
      %p85 = scmp.ne.s32.totalorder %s80, %s82
      %p86 = scmp.eq.s32.totalorder %s34, 0
      %p87 = por %p85, %p86
      %p88 = scmp.ne.s32.totalorder %s80, %s82
      %p89 = scmp.eq.s32.totalorder %s39, 2
      %p90 = por %p88, %p89
      %p91 = scmp.ne.s32.totalorder %s82, %s83
      %p92 = scmp.eq.s32.totalorder %s39, 0
      %p93 = por %p91, %p92
      %p94 = scmp.ne.s32.totalorder %s82, %s83
      %p95 = scmp.eq.s32.totalorder %s40, 2
      %p96 = por %p94, %p95
      %p98 = scmp.ne.s32.totalorder %s83, %s97
      %p99 = scmp.eq.s32.totalorder %s40, 0
      %p100 = por %p98, %p99
      %s102 = sadd.s32 %s101, 1
      %p105 = scmp.eq.s32.totalorder %s34, 2
      %p106 = scmp.ne.s32.totalorder %s101, %s103
      %p107 = scmp.eq.s32.totalorder %s34, 0
      %p108 = por %p106, %p107
      %p109 = scmp.ne.s32.totalorder %s101, %s103
      %p110 = scmp.eq.s32.totalorder %s39, 2
      %p111 = por %p109, %p110
      %p112 = scmp.ne.s32.totalorder %s103, %s104
      %p113 = scmp.eq.s32.totalorder %s39, 0
      %p114 = por %p112, %p113
      %p115 = scmp.ne.s32.totalorder %s103, %s104
      %p116 = scmp.eq.s32.totalorder %s40, 2
      %p117 = por %p115, %p116
      %p119 = scmp.ne.s32.totalorder %s104, %s118
      %p120 = scmp.eq.s32.totalorder %s40, 0
      %p121 = por %p119, %p120
      %s122 = ssub.s32 %s41, %s53
      %p123 = scmp.eq.s32.totalorder %s122, 0
      %s125 = sadd.s32 %s124, 1
      %s126 = scalar_select %p123, %s124, %s125
      %p129 = pneg %p123
      %p130 = scmp.eq.s32.totalorder %s34, 2
      %p131 = por %p129, %p130
      %p132 = scmp.ne.s32.totalorder %s124, %s127
      %p133 = scmp.eq.s32.totalorder %s34, 0
      %p134 = por %p132, %p133
      %p135 = scmp.ne.s32.totalorder %s124, %s127
      %p136 = scmp.eq.s32.totalorder %s39, 2
      %p137 = por %p135, %p136
      %p138 = scmp.ne.s32.totalorder %s127, %s128
      %p139 = scmp.eq.s32.totalorder %s39, 0
      %p140 = por %p138, %p139
      %p141 = scmp.ne.s32.totalorder %s127, %s128
      %p142 = scmp.eq.s32.totalorder %s40, 2
      %p143 = por %p141, %p142
      %p145 = scmp.ne.s32.totalorder %s128, %s144
      %p146 = scmp.eq.s32.totalorder %s40, 0
      %p147 = por %p145, %p146
      %s148 = ssub.s32 %s41, %s53
      %p149 = scmp.eq.s32.totalorder %s148, 0
      %s151 = sadd.s32 %s150, 1
      %s152 = scalar_select %p149, %s150, %s151
      %p155 = pneg %p149
      %p156 = scmp.eq.s32.totalorder %s34, 2
      %p157 = por %p155, %p156
      %p158 = scmp.ne.s32.totalorder %s150, %s153
      %p159 = scmp.eq.s32.totalorder %s34, 0
      %p160 = por %p158, %p159
      %p161 = scmp.ne.s32.totalorder %s150, %s153
      %p162 = scmp.eq.s32.totalorder %s39, 2
      %p163 = por %p161, %p162
      %p164 = scmp.ne.s32.totalorder %s153, %s154
      %p165 = scmp.eq.s32.totalorder %s39, 0
      %p166 = por %p164, %p165
      %p167 = scmp.ne.s32.totalorder %s153, %s154
      %p168 = scmp.eq.s32.totalorder %s40, 2
      %p169 = por %p167, %p168
      %p171 = scmp.ne.s32.totalorder %s154, %s170
      %p172 = scmp.eq.s32.totalorder %s40, 0
      %p173 = por %p171, %p172
      %s174 = ssub.s32 %s41, %s53
      %p175 = scmp.eq.s32.totalorder %s174, 0
      %s177 = sadd.s32 %s176, 1
      %s178 = scalar_select %p175, %s176, %s177
      %p181 = pneg %p175
      %p182 = scmp.eq.s32.totalorder %s34, 2
      %p183 = por %p181, %p182
      %p184 = scmp.ne.s32.totalorder %s176, %s179
      %p185 = scmp.eq.s32.totalorder %s34, 0
      %p186 = por %p184, %p185
      %p187 = scmp.ne.s32.totalorder %s176, %s179
      %p188 = scmp.eq.s32.totalorder %s39, 2
      %p189 = por %p187, %p188
      %p190 = scmp.ne.s32.totalorder %s179, %s180
      %p191 = scmp.eq.s32.totalorder %s39, 0
      %p192 = por %p190, %p191
      %p193 = scmp.ne.s32.totalorder %s179, %s180
      %p194 = scmp.eq.s32.totalorder %s40, 2
      %p195 = por %p193, %p194
      %p197 = scmp.ne.s32.totalorder %s180, %s196
      %p198 = scmp.eq.s32.totalorder %s40, 0
      %p199 = por %p197, %p198
      %p200 = scmp.le.s32.totalorder 1, %s34
      %p201 = scmp.lt.s32.totalorder %s34, 4
      %p202 = pnand %p200, %p201
      %p203 = pneg %p202
      // Predicated region
      $region9: #{tpu_custom_call.1} parent=5 // pred_check
        _
      $region10: #{tpu_custom_call.1} parent=5 // pred_check_branch
        %205 = sbr.rel (%p202) target = $region12
      $region11: #{tpu_custom_call.1} parent=5 // pred_region
        %s206 = ssub.s32 %s34, 1
        // Predicated region
        $region13: #{tpu_custom_call.1} parent=11 // pred_check
          %p207 = pneg %p93
        $region14: #{tpu_custom_call.1} parent=11 // pred_check_branch
          %209 = sbr.rel (%p207) target = $region16
        $region15: #{tpu_custom_call.1} parent=11 // pred_region
          _
        $region16: #{tpu_custom_call.1} parent=11 // pred_fallthru
          _
        // Predicated region
        $region17: #{tpu_custom_call.1} parent=11 // pred_check
          %p210 = pneg %p114
        $region18: #{tpu_custom_call.1} parent=11 // pred_check_branch
          %212 = sbr.rel (%p210) target = $region20
        $region19: #{tpu_custom_call.1} parent=11 // pred_region
          _
        $region20: #{tpu_custom_call.1} parent=11 // pred_fallthru
          _
        // Predicated region
        $region21: #{tpu_custom_call.1} parent=11 // pred_check
          %p213 = pneg %p140
        $region22: #{tpu_custom_call.1} parent=11 // pred_check_branch
          %215 = sbr.rel (%p213) target = $region24
        $region23: #{tpu_custom_call.1} parent=11 // pred_region
          %217 = vsyncadd [#allocation7], 0
          %s218 = smul.addr %s43, 8
          %s219 = scalar_lea.hbm %s6, %s218
          %s220 = sshll.u32 %s219, 4
          %s221 = int_to_ptr.hbm [resolvable:$true] %s220
          %s222 = sshll.u32 [#allocation6], 4
          %s223 = int_to_ptr.vmem [resolvable:$true] %s222
          %228 = dma.hbm_to_vmem [thread:$0]  %s221, 2048, %s223, [#allocation7], 128, 128, 8
        $region24: #{tpu_custom_call.1} parent=11 // pred_fallthru
          _
        // Predicated region
        $region25: #{tpu_custom_call.1} parent=11 // pred_check
          %p229 = pneg %p166
        $region26: #{tpu_custom_call.1} parent=11 // pred_check_branch
          %231 = sbr.rel (%p229) target = $region28
        $region27: #{tpu_custom_call.1} parent=11 // pred_region
          %p232 = scmp.lt.s32.totalorder %s43, 0
          %s233 = scalar_select %p232, %s43, 0
          %s234 = scalar_lea.vmem %s7, %s233
        $region28: #{tpu_custom_call.1} parent=11 // pred_fallthru
          _
      $region12: #{tpu_custom_call.1} parent=5 // pred_fallthru
        _
      %p235 = scmp.lt.s32.totalorder %s34, 3
      // Predicated region
      $region29: #{tpu_custom_call.1} parent=5 // pred_check
        %p236 = pneg %p235
      $region30: #{tpu_custom_call.1} parent=5 // pred_check_branch
        %238 = sbr.rel (%p236) target = $region32
      $region31: #{tpu_custom_call.1} parent=5 // pred_region
        // Predicated region
        $region33: #{tpu_custom_call.1} parent=31 // pred_check
          %p239 = pneg %p66
        $region34: #{tpu_custom_call.1} parent=31 // pred_check_branch
          %241 = sbr.rel (%p239) target = $region36
        $region35: #{tpu_custom_call.1} parent=31 // pred_region
          %p242 = scmp.lt.s32.totalorder %s42, 2
          %s243 = scalar_select %p242, %s42, 2
          %s244 = smul.addr %s243, 8
          %s245 = scalar_lea.vmem %s3, %s244
        $region36: #{tpu_custom_call.1} parent=31 // pred_fallthru
          _
      $region32: #{tpu_custom_call.1} parent=5 // pred_fallthru
        _
      %p246 = scmp.le.s32.totalorder 1, %s34
      %p247 = scmp.lt.s32.totalorder %s34, 4
      %p248 = pnand %p246, %p247
      %p249 = pneg %p248
      // Predicated region
      $region37: #{tpu_custom_call.1} parent=5 // pred_check
        _
      $region38: #{tpu_custom_call.1} parent=5 // pred_check_branch
        %251 = sbr.rel (%p248) target = $region40
      $region39: #{tpu_custom_call.1} parent=5 // pred_region
        %s252 = ssub.s32 %s34, 1
        // Predicated region
        $region41: #{tpu_custom_call.1} parent=39 // pred_check
          %p253 = pneg %p140
        $region42: #{tpu_custom_call.1} parent=39 // pred_check_branch
          %255 = sbr.rel (%p253) target = $region44
        $region43: #{tpu_custom_call.1} parent=39 // pred_region
          %257 = dma.done [#allocation7], 2048
        $region44: #{tpu_custom_call.1} parent=39 // pred_fallthru
          _
        %p258 = scmp.lt.s32.totalorder %s44, 2
        %s259 = scalar_select %p258, %s44, 2
        %s260 = smul.addr %s259, 8
        %s261 = scalar_lea.vmem %s3, %s260
        %p262 = pneg %p72
        %p263 = pneg %p69
        %p264 = pneg %p93
        %p265 = pneg %p90
        %p266 = pneg %p114
        %p267 = pneg %p111
        %p268 = pneg %p140
        %p269 = pneg %p137
        %p270 = scmp.lt.s32.totalorder %s43, 0
        %s271 = scalar_select %p270, %s43, 0
        %s272 = scalar_lea.vmem %s7, %s271
        %p273 = pneg %p166
        %p274 = pneg %p163
        %p275 = pneg %p192
        %p276 = pneg %p189
        %p277 = scmp.lt.s32.totalorder %s44, 2
        %s278 = scalar_select %p277, %s44, 2
        %s279 = smul.addr %s278, 8
        %s280 = scalar_lea.vmem %s3, %s279
        %p281 = scmp.lt.s32.totalorder %s43, 0
        %s282 = scalar_select %p281, %s43, 0
        %s283 = scalar_lea.vmem %s7, %s282
        %p284 = scmp.eq.s32.totalorder %s44, 0
        // Predicated region
        $region45: #{tpu_custom_call.1} parent=39 // pred_check
          %p285 = pneg %p284
        $region46: #{tpu_custom_call.1} parent=39 // pred_check_branch
          %287 = sbr.rel (%p285) target = $region48
        $region47: #{tpu_custom_call.1} parent=39 // pred_region
          %288 = vst [vmem:[#allocation9] sm:$0xff] 0.0
        $region48: #{tpu_custom_call.1} parent=39 // pred_fallthru
          _
        %v289 = vld [vmem:[%s280] sm:$0xff]
        %v290 = vld [vmem:[%s4] sm:$0xff]
        %v291 = vld [vmem:[%s4 + $0x8] sm:$0xff]
        %v292 = vld [vmem:[%s5] sm:$0x1]
        %v294 = vperm.slane %v292, 0
        %vm296 = vcmask 130048
        %v298 = vsel %vm296, %v289, 0
        %300 = vmatpush.msra.mxu0 0.0
        %301 = vmatpush.msra.mxu0 0.0
        %302 = vmatpush.msra.mxu0 0.0
        %303 = vmatpush.msra.mxu0 0.0
        %304 = vmatpush.msra.mxu0 0.0
        %305 = vmatpush.msra.mxu0 0.0
        %306 = vmatpush.msra.mxu0 0.0
        %307 = vmatpush.msra.mxu0 0.0
        %308 = vmatpush.msra.mxu0 0.0
        %309 = vmatpush.msra.mxu0 0.0
        %310 = vmatpush.msra.mxu0 0.0
        %311 = vmatpush.msra.mxu0 0.0
        %312 = vmatpush.msra.mxu0 0.0
        %313 = vmatpush.msra.mxu0 0.0
        %314 = vmatpush.msra.mxu0 %v291
        %315 = vmatpush.msra.mxu0 %v290
        %316 = vmatmul.f32.gmra.mxu0 %v298
        %v317 = vpop.f32.mrf.mxu0
        %v318 = vadd.f32 %v294, %v317
        %319 = vdwg.mxu0
        %v320 = vmax.f32 %v318, 0.0
        %v321 = vld [vmem:[#allocation6] sm:$0xff]
        %v322 = vld [vmem:[#allocation6 + $0x8] sm:$0xff]
        %v323 = vld [vmem:[#allocation6 + $0x10] sm:$0xff]
        %v324 = vld [vmem:[#allocation6 + $0x18] sm:$0xff]
        %v325 = vld [vmem:[#allocation6 + $0x20] sm:$0xff]
        %v326 = vld [vmem:[#allocation6 + $0x28] sm:$0xff]
        %v327 = vld [vmem:[#allocation6 + $0x30] sm:$0xff]
        %v328 = vld [vmem:[#allocation6 + $0x38] sm:$0xff]
        %v329 = vld [vmem:[#allocation6 + $0x40] sm:$0xff]
        %v330 = vld [vmem:[#allocation6 + $0x48] sm:$0xff]
        %v331 = vld [vmem:[#allocation6 + $0x50] sm:$0xff]
        %v332 = vld [vmem:[#allocation6 + $0x58] sm:$0xff]
        %v333 = vld [vmem:[#allocation6 + $0x60] sm:$0xff]
        %v334 = vld [vmem:[#allocation6 + $0x68] sm:$0xff]
        %v335 = vld [vmem:[#allocation6 + $0x70] sm:$0xff]
        %v336 = vld [vmem:[#allocation6 + $0x78] sm:$0xff]
        %v337 = vld [vmem:[%s283] sm:$0x1]
        %v339 = vperm.slane %v337, 0
        %341 = vmatpush.msra.mxu0 %v336
        %342 = vmatpush.msra.mxu0 %v335
        %343 = vmatpush.msra.mxu0 %v334
        %344 = vmatpush.msra.mxu0 %v333
        %345 = vmatpush.msra.mxu0 %v332
        %346 = vmatpush.msra.mxu0 %v331
        %347 = vmatpush.msra.mxu0 %v330
        %348 = vmatpush.msra.mxu0 %v329
        %349 = vmatpush.msra.mxu0 %v328
        %350 = vmatpush.msra.mxu0 %v327
        %351 = vmatpush.msra.mxu0 %v326
        %352 = vmatpush.msra.mxu0 %v325
        %353 = vmatpush.msra.mxu0 %v324
        %354 = vmatpush.msra.mxu0 %v323
        %355 = vmatpush.msra.mxu0 %v322
        %356 = vmatpush.msra.mxu0 %v321
        %357 = vmatmul.f32.gmra.mxu0 %v320
        %v358 = vpop.f32.mrf.mxu0
        %v359 = vadd.f32 %v339, %v358
        %360 = vdwg.mxu0
        %v361 = vmax.f32 %v359, 0.0
        %s362 = smul.u32 %s44, 8
        %s363 = sld [smem:[#allocation3 + %s44]]
        %s364 = sld [smem:[#allocation4 + %s44]]
        %p365 = scmp.eq.s32.totalorder %s363, %s364
        %s366 = sadd.s32 %s362, 8
        %s367 = sadd.s32 %s363, 1
        %s368 = sld [smem:[#allocation5 + %s367]]
        %p369 = scmp.le.s32.totalorder %s366, %s368
        %p370 = pnand %p365, %p369
        %p371 = pneg %p370
        // Predicated region
        $region49: #{tpu_custom_call.1} parent=39 // pred_check
          _
        $region50: #{tpu_custom_call.1} parent=39 // pred_check_branch
          %373 = sbr.rel (%p370) target = $region52
        $region51: #{tpu_custom_call.1} parent=39 // pred_region
          %v374 = vrot.slane %v361, 4
          %v375 = vmax.f32 %v361, %v374
          %v376 = vrot.slane %v375, 2
          %v377 = vmax.f32 %v375, %v376
          %v378 = vrot.slane %v377, 1
          %v379 = vmax.f32 %v377, %v378
          %s380 = scalar_lea.vmem [#allocation9], %s363
          %v381 = vld [vmem:[%s380] sm:$0x1]
          %v382 = vmax.f32 %v381, %v379
          %383 = vst [vmem:[%s380] sm:$0x1] %v382
        $region52: #{tpu_custom_call.1} parent=39 // pred_fallthru
          _
        %p384 = pneg %p371
        // Predicated region
        $region53: #{tpu_custom_call.1} parent=39 // pred_check
          _
        $region54: #{tpu_custom_call.1} parent=39 // pred_check_branch
          %386 = sbr.rel (%p371) target = $region56
        $region55: #{tpu_custom_call.1} parent=39 // pred_region
          %v387 = vlaneseq
          %v388 = vshrl.u32 %v387, 7
          %v389 = vstv %s362
          %v390 = vadd.s32 %v388, %v389
          %s391 = sadd.s32 %s364, 1
          // While loop
          $region57: #{tpu_custom_call.1} parent=55 // loop_pre_header
            _
          $region58: #{tpu_custom_call.1} parent=55 // loop_header
            %s393 = sphi %s363, %s395
            %p394 = scmp.ge.s32.totalorder %s393, %s391
          $region59: #{tpu_custom_call.1} parent=55 // loop_header_branch
            %397 = sbr.rel (%p394) target = $region63
          $region60: #{tpu_custom_call.1} parent=55 // loop_body
            %s398 = sld [smem:[#allocation5 + %s393]]
            %s399 = sadd.s32 %s393, 1
            %s400 = sld [smem:[#allocation5 + %s399]]
            %v401 = vstv %s398
            %vm402 = vcmp.ge.s32.totalorder %v390, %v401
            %v403 = vstv %s400
            %vm404 = vcmp.lt.s32.totalorder %v390, %v403
            %vm405 = vmand %vm402, %vm404
            %v406 = vsel %vm405, 1, 0
            %vm407 = vcmp.eq.s32.totalorder %v406, 1
            %v408 = vsel %vm407, %v361, 0.0
            %v409 = vrot.slane %v408, 4
            %v410 = vmax.f32 %v408, %v409
            %v411 = vrot.slane %v410, 2
            %v412 = vmax.f32 %v410, %v411
            %v413 = vrot.slane %v412, 1
            %v414 = vmax.f32 %v412, %v413
            %s415 = scalar_lea.vmem [#allocation9], %s393
            %v416 = vld [vmem:[%s415] sm:$0x1]
            %v417 = vmax.f32 %v416, %v414
            %418 = vst [vmem:[%s415] sm:$0x1] %v417
          $region61: #{tpu_custom_call.1} parent=55 // loop_footer
            %s395 = sadd.s32 %s393, 1
          $region62: #{tpu_custom_call.1} parent=55 // loop_footer_branch
            %392 = sbr.rel target = $region58
          $region63: #{tpu_custom_call.1} parent=55 // loop_exit
            _
        $region56: #{tpu_custom_call.1} parent=39 // pred_fallthru
          _
        // Predicated region
        $region64: #{tpu_custom_call.1} parent=39 // pred_check
          %p419 = pneg %p189
        $region65: #{tpu_custom_call.1} parent=39 // pred_check_branch
          %421 = sbr.rel (%p419) target = $region67
        $region66: #{tpu_custom_call.1} parent=39 // pred_region
          %423 = vsyncadd [#allocation8], 0
          %s424 = smul.addr %s43, 8
          %s425 = scalar_lea.hbm %s8, %s424
          %s427 = sshll.u32 [#allocation9], 4
          %s428 = int_to_ptr.vmem [resolvable:$true] %s427
          %s429 = sshll.u32 %s425, 4
          %s430 = int_to_ptr.hbm [resolvable:$true] %s429
          %432 = dma.vmem_to_hbm [thread:$0]  %s428, 128, %s430, [#allocation8]
        $region67: #{tpu_custom_call.1} parent=39 // pred_fallthru
          _
        // Predicated region
        $region68: #{tpu_custom_call.1} parent=39 // pred_check
          %p433 = pneg %p189
        $region69: #{tpu_custom_call.1} parent=39 // pred_check_branch
          %435 = sbr.rel (%p433) target = $region71
        $region70: #{tpu_custom_call.1} parent=39 // pred_region
          %437 = dma.done [#allocation8], 128
        $region71: #{tpu_custom_call.1} parent=39 // pred_fallthru
          _
      $region40: #{tpu_custom_call.1} parent=5 // pred_fallthru
        _
      %p438 = scmp.le.s32.totalorder 2, %s34
      // Predicated region
      $region72: #{tpu_custom_call.1} parent=5 // pred_check
        %p439 = pneg %p438
      $region73: #{tpu_custom_call.1} parent=5 // pred_check_branch
        %441 = sbr.rel (%p439) target = $region75
      $region74: #{tpu_custom_call.1} parent=5 // pred_region
        %s442 = ssub.s32 %s34, 2
      $region75: #{tpu_custom_call.1} parent=5 // pred_fallthru
        _
    $region6: #{tpu_custom_call.1} parent=1 // loop_footer
      %s38 = sadd.s32 1, %s34
    $region7: #{tpu_custom_call.1} parent=1 // loop_footer_branch
      %33 = sbr.rel target = $region3
    $region8: #{tpu_custom_call.1} parent=1 // loop_exit
      _
    %443 = vsyncpa [#allocation7], 1
    %s444 = scalar_lea.sflag [#allocation7], 1
    %445 = vsyncpa %s444, 1
    %446 = vsyncpa [#allocation8], 1
    %s447 = scalar_lea.sflag [#allocation8], 1
    %448 = vsyncpa %s447, 1

</llo_original>
